<compile_context>
chip_gen: v7x
topology: tpu7x:2x2x1
jax: 0.10.0
libtpu: 0.0.40
codegen_flags: <defaults>
</compile_context>

<pallas_src>
import functools

import jax
import jax.numpy as jnp
from jax import lax
from jax.experimental import pallas as pl
from jax.experimental.pallas import tpu as pltpu


def _sa_kernel(x_ref, wq_ref, wv_ref, bv_ref, wt_ref, bt_ref, out_ref,
               k_ref, vy_ref, acc_ref, *, channels, points, tq):
    C, N, TQ = channels, points, tq
    qi = pl.program_id(1)

    # ---- once per batch element: shared q/k conv, v conv, zero the accumulator ----
    @pl.when(qi == 0)
    def _init():
        xb = x_ref[...].astype(jnp.bfloat16)
        # k = wq @ x  (q_conv and k_conv share weights -> q is a column slice of k)
        k_ref[...] = jnp.dot(wq_ref[...], xb,
                             preferred_element_type=jnp.float32).astype(jnp.bfloat16)
        v = jnp.dot(wv_ref[...], xb, preferred_element_type=jnp.float32) + bv_ref[...]
        vy_ref[pl.ds(0, C), :] = v
        # Extra all-ones row: its output row of the [v;1] @ p matmul accumulates the
        # attention column sums needed for the offset-attention renormalization.
        vy_ref[pl.ds(C, 1), :] = jnp.ones((1, N), jnp.float32)
        acc_ref[...] = jnp.zeros_like(acc_ref)

    # ---- query tile: rows [qi*TQ, (qi+1)*TQ) of the attention matrix ----
    start = pl.multiple_of(qi * TQ, TQ)
    q_blk = k_ref[:, pl.ds(start, TQ)]                                # (Cq, TQ) bf16
    # energy = q_blk^T @ k : contract the Cq axis directly (no materialized transpose)
    energy = lax.dot_general(q_blk, k_ref[...],
                             (((0,), (0,)), ((), ())),
                             preferred_element_type=jnp.float32)      # (TQ, N) f32
    m = jnp.max(energy, axis=-1, keepdims=True)                       # (TQ, 1)
    e = jnp.exp(energy - m)                                           # (TQ, N) f32
    r_inv = pl.reciprocal(jnp.sum(e, axis=-1, keepdims=True),
                          approx=True)                                # (TQ, 1) on EUP
    # Row softmax normalization: one broadcast multiply fused with the bf16 cast
    # (no divides anywhere on the big tile).
    p = (e * r_inv).astype(jnp.bfloat16)                              # (TQ, N) bf16

    lhs = vy_ref[:, pl.ds(start, TQ)].astype(jnp.bfloat16)            # (C+1, TQ)
    acc_ref[...] += jnp.dot(lhs, p, preferred_element_type=jnp.float32)   # (C+1, N)

    # ---- once per batch element: col renorm, trans_conv (+folded BN), ReLU, residual
    @pl.when(qi == pl.num_programs(1) - 1)
    def _finalize():
        x = x_ref[...]                                                # (C, N) f32
        col_inv = pl.reciprocal(acc_ref[pl.ds(C, 1), :] + 1e-9, approx=True)  # (1, N)
        x_r = acc_ref[pl.ds(0, C), :] * col_inv                       # (C, N)
        d = (x - x_r).astype(jnp.bfloat16)
        t = jnp.dot(wt_ref[...], d, preferred_element_type=jnp.float32) + bt_ref[...]
        out_ref[...] = x + jnp.maximum(t, 0.0)


def sa_layer(x, params, *, tq=128):
    B, C, N = x.shape
    Cq = params["wq"].shape[0]
    tq = min(tq, N)
    assert N % tq == 0, "N must be a multiple of the query tile size"
    n_q = N // tq

    # Fold eval-mode BatchNorm1d into trans_conv:  s = gamma / sqrt(var + eps)
    #   bn(wt @ d + bt) = (s * wt) @ d + (s * (bt - mean) + beta)
    s = params["gamma"] * jax.lax.rsqrt(params["var"] + 1e-5)         # (C, 1)
    wt_f = (params["wt"] * s).astype(jnp.bfloat16)                    # (C, C) bf16
    bt_f = s * (params["bt"] - params["mean"]) + params["beta"]       # (C, 1) f32

    wq_bf = params["wq"].astype(jnp.bfloat16)
    wv_bf = params["wv"].astype(jnp.bfloat16)

    kernel = functools.partial(_sa_kernel, channels=C, points=N, tq=tq)

    grid_spec = pltpu.PrefetchScalarGridSpec(
        num_scalar_prefetch=0,
        grid=(B, n_q),
        in_specs=[
            pl.BlockSpec((None, C, N), lambda b, q: (b, 0, 0)),   # x (batch squeezed)
            pl.BlockSpec((Cq, C), lambda b, q: (0, 0)),           # wq (== wk, shared)
            pl.BlockSpec((C, C), lambda b, q: (0, 0)),            # wv
            pl.BlockSpec((C, 1), lambda b, q: (0, 0)),            # bv
            pl.BlockSpec((C, C), lambda b, q: (0, 0)),            # wt (BN folded)
            pl.BlockSpec((C, 1), lambda b, q: (0, 0)),            # bt (BN folded)
        ],
        out_specs=pl.BlockSpec((None, C, N), lambda b, q: (b, 0, 0)),
        scratch_shapes=[
            pltpu.VMEM((Cq, N), jnp.bfloat16),      # k (= q) activations
            pltpu.VMEM((C + 1, N), jnp.float32),    # [v ; ones]  (ones row -> col sums)
            pltpu.VMEM((C + 1, N), jnp.float32),    # [x_r unnormalized ; col_sum] acc
        ],
    )

    return pl.pallas_call(
        kernel,
        out_shape=jax.ShapeDtypeStruct((B, C, N), jnp.float32),
        grid_spec=grid_spec,
        compiler_params=pltpu.CompilerParams(
            dimension_semantics=("parallel", "arbitrary"),
            # Tiled working set is only ~TQ*N per step; raise this for very large N.
            vmem_limit_bytes=32 * 1024 * 1024,
        ),
    )(x, wq_bf, wv_bf, params["bv"], wt_f, bt_f)


def sa_layer_ref(x, p, mm_dtype=jnp.float32):
    """Pure-JAX reference mirroring the PyTorch forward (eval-mode BN).

    mm_dtype lets us mirror the kernel's bf16 MXU operands (f32 accumulation)."""
    c = lambda a: a.astype(mm_dtype)
    f32 = dict(preferred_element_type=jnp.float32)
    q = jnp.einsum("oc,bcn->bon", c(p["wq"]), c(x), **f32)            # (B, Cq, N)
    k = q                                                             # shared weight
    v = jnp.einsum("oc,bcn->bon", c(p["wv"]), c(x), **f32) + p["bv"][None]
    energy = jnp.einsum("bcn,bcm->bnm", c(q), c(k), **f32)            # x_q @ x_k
    attention = jax.nn.softmax(energy, axis=-1)
    attn = 1e-9 + attention.sum(axis=1, keepdims=True)
    attention = attention / attn
    x_r = jnp.einsum("bcn,bnm->bcm", c(v), c(attention), **f32)
    t = jnp.einsum("oc,bcn->bon", c(p["wt"]), c(x - x_r), **f32) + p["bt"][None]
    bn = p["gamma"][None] * (t - p["mean"][None]) * jax.lax.rsqrt(p["var"][None] + 1e-5) \
         + p["beta"][None]
    return x + jnp.maximum(bn, 0.0)


def make_params(key, channels):
    Cq = channels // 4
    ks = jax.random.split(key, 8)
    return {
        "wq":    jax.random.normal(ks[0], (Cq, channels), jnp.float32) * 0.1,
        "wv":    jax.random.normal(ks[1], (channels, channels), jnp.float32) * 0.1,
        "bv":    jax.random.normal(ks[2], (channels, 1), jnp.float32) * 0.1,
        "wt":    jax.random.normal(ks[3], (channels, channels), jnp.float32) * 0.1,
        "bt":    jax.random.normal(ks[4], (channels, 1), jnp.float32) * 0.1,
        "gamma": 1.0 + 0.1 * jax.random.normal(ks[5], (channels, 1), jnp.float32),
        "beta":  0.1 * jax.random.normal(ks[6], (channels, 1), jnp.float32),
        "mean":  0.1 * jax.random.normal(ks[7], (channels, 1), jnp.float32),
        "var":   jnp.ones((channels, 1), jnp.float32),
    }


if __name__ == "__main__":
    B, C, N = 2, 32, 256          # channels -> Cq = 8; two query tiles of 128
    key = jax.random.PRNGKey(0)
    kx, kp = jax.random.split(key)
    x = jax.random.normal(kx, (B, C, N), jnp.float32)
    params = make_params(kp, C)

    out = jax.block_until_ready(sa_layer(x, params, tq=128))
    # Compare against a reference that also feeds the MXU bf16 operands (the kernel
    # keeps all elementwise math and accumulation in f32).
    ref = jax.block_until_ready(sa_layer_ref(x, params, mm_dtype=jnp.bfloat16))

    assert out.shape == (B, C, N)
    max_err = jnp.max(jnp.abs(out - ref))
    assert jnp.allclose(out, ref, atol=2e-2, rtol=2e-2), f"max abs err {max_err}"
    print("KERNEL_OK")
</pallas_src>

<mosaic_0001>
module attributes {stable_mosaic.version = 11 : i64} {
  func.func @_sa_kernel(%arg0: i32, %arg1: i32, %arg2: memref<1x32x256xf32, #tpu.memory_space<vmem>>, %arg3: memref<8x32xbf16, #tpu.memory_space<vmem>>, %arg4: memref<32x32xbf16, #tpu.memory_space<vmem>>, %arg5: memref<32x1xf32, #tpu.memory_space<vmem>>, %arg6: memref<32x32xbf16, #tpu.memory_space<vmem>>, %arg7: memref<32x1xf32, #tpu.memory_space<vmem>>, %arg8: memref<1x32x256xf32, #tpu.memory_space<vmem>>, %arg9: memref<8x256xbf16, #tpu.memory_space<vmem>>, %arg10: memref<33x256xf32, #tpu.memory_space<vmem>>, %arg11: memref<33x256xf32, #tpu.memory_space<vmem>>) attributes {dimension_semantics = [#tpu.dimension_semantics<parallel>, #tpu.dimension_semantics<arbitrary>], iteration_bounds = array<i64: 2, 2>, scalar_prefetch = 0 : i64, scratch_operands = 3 : i64, tpu.core_type = #tpu.core_type<tc>, window_params = [{transform_indices = @transform_0, window_bounds = array<i64: 1, 32, 256>}, {pipeline_mode = #tpu.pipeline_mode<synchronous>, transform_indices = @transform_1, window_bounds = array<i64: 8, 32>}, {pipeline_mode = #tpu.pipeline_mode<synchronous>, transform_indices = @transform_2, window_bounds = array<i64: 32, 32>}, {pipeline_mode = #tpu.pipeline_mode<synchronous>, transform_indices = @transform_3, window_bounds = array<i64: 32, 1>}, {pipeline_mode = #tpu.pipeline_mode<synchronous>, transform_indices = @transform_4, window_bounds = array<i64: 32, 32>}, {pipeline_mode = #tpu.pipeline_mode<synchronous>, transform_indices = @transform_5, window_bounds = array<i64: 32, 1>}, {transform_indices = @transform_6, window_bounds = array<i64: 1, 32, 256>}]} {
    %c0_i32 = arith.constant 0 : i32
    %0 = arith.cmpi eq, %arg1, %c0_i32 : i32
    %1 = arith.extui %0 : i1 to i32
    %c0_i32_0 = arith.constant 0 : i32
    %2 = arith.cmpi ne, %1, %c0_i32_0 : i32
    scf.if %2 {
      %c0_12 = arith.constant 0 : index
      %c0_13 = arith.constant 0 : index
      %c0_14 = arith.constant 0 : index
      %30 = vector.load %arg2[%c0_12, %c0_13, %c0_14] : memref<1x32x256xf32, #tpu.memory_space<vmem>>, vector<1x32x256xf32>
      %31 = vector.shape_cast %30 : vector<1x32x256xf32> to vector<32x256xf32>
      %32 = arith.truncf %31 : vector<32x256xf32> to vector<32x256xbf16>
      %c0_15 = arith.constant 0 : index
      %c0_16 = arith.constant 0 : index
      %33 = vector.load %arg3[%c0_15, %c0_16] : memref<8x32xbf16, #tpu.memory_space<vmem>>, vector<8x32xbf16>
      %cst_17 = arith.constant dense<0.000000e+00> : vector<8x256xf32>
      %34 = tpu.matmul %33, %32, %cst_17 {dimension_numbers = #tpu.dot_dimension_numbers<[1], [0], [0], [1], [0, 0, 1, 1], [], []>} : vector<8x32xbf16>, vector<32x256xbf16>, vector<8x256xf32> -> vector<8x256xf32>
      %35 = arith.truncf %34 : vector<8x256xf32> to vector<8x256xbf16>
      %c0_18 = arith.constant 0 : index
      %c0_19 = arith.constant 0 : index
      %36 = vector.load %arg9[%c0_18, %c0_19] : memref<8x256xbf16, #tpu.memory_space<vmem>>, vector<8x256xbf16>
      tpu.vector_store %arg9[%c0_18, %c0_19], %35 {strides = array<i32>} : memref<8x256xbf16, #tpu.memory_space<vmem>>, vector<8x256xbf16>,
      %c0_20 = arith.constant 0 : index
      %c0_21 = arith.constant 0 : index
      %37 = vector.load %arg4[%c0_20, %c0_21] : memref<32x32xbf16, #tpu.memory_space<vmem>>, vector<32x32xbf16>
      %cst_22 = arith.constant dense<0.000000e+00> : vector<32x256xf32>
      %38 = tpu.matmul %37, %32, %cst_22 {dimension_numbers = #tpu.dot_dimension_numbers<[1], [0], [0], [1], [0, 0, 1, 1], [], []>} : vector<32x32xbf16>, vector<32x256xbf16>, vector<32x256xf32> -> vector<32x256xf32>
      %c0_23 = arith.constant 0 : index
      %c0_24 = arith.constant 0 : index
      %39 = vector.load %arg5[%c0_23, %c0_24] : memref<32x1xf32, #tpu.memory_space<vmem>>, vector<32x1xf32>
      %40 = vector.broadcast %39 : vector<32x1xf32> to vector<32x256xf32>
      %41 = arith.addf %38, %40 : vector<32x256xf32>
      %c0_25 = arith.constant 0 : index
      %c0_26 = arith.constant 0 : index
      %42 = vector.load %arg10[%c0_25, %c0_26] : memref<33x256xf32, #tpu.memory_space<vmem>>, vector<32x256xf32>
      tpu.vector_store %arg10[%c0_25, %c0_26], %41 {strides = array<i32>} : memref<33x256xf32, #tpu.memory_space<vmem>>, vector<32x256xf32>,
      %cst_27 = arith.constant 1.000000e+00 : f32
      %43 = vector.broadcast %cst_27 : f32 to vector<1x256xf32>
      %c32 = arith.constant 32 : index
      %c0_28 = arith.constant 0 : index
      %44 = vector.load %arg10[%c32, %c0_28] : memref<33x256xf32, #tpu.memory_space<vmem>>, vector<1x256xf32>
      tpu.vector_store %arg10[%c32, %c0_28], %43 {strides = array<i32>} : memref<33x256xf32, #tpu.memory_space<vmem>>, vector<1x256xf32>,
      %cst_29 = arith.constant 0.000000e+00 : f32
      %45 = vector.broadcast %cst_29 : f32 to vector<33x256xf32>
      %c0_30 = arith.constant 0 : index
      %c0_31 = arith.constant 0 : index
      %46 = vector.load %arg11[%c0_30, %c0_31] : memref<33x256xf32, #tpu.memory_space<vmem>>, vector<33x256xf32>
      tpu.vector_store %arg11[%c0_30, %c0_31], %45 {strides = array<i32>} : memref<33x256xf32, #tpu.memory_space<vmem>>, vector<33x256xf32>,
    } else {
    }
    %c128_i32 = arith.constant 128 : i32
    %3 = arith.muli %arg1, %c128_i32 : i32
    %4 = tpu.assume_multiple %3, 128 : i32
    %c0 = arith.constant 0 : index
    %5 = arith.index_cast %4 : i32 to index
    %6 = vector.load %arg9[%c0, %5] : memref<8x256xbf16, #tpu.memory_space<vmem>>, vector<8x128xbf16>
    %c0_1 = arith.constant 0 : index
    %c0_2 = arith.constant 0 : index
    %7 = vector.load %arg9[%c0_1, %c0_2] : memref<8x256xbf16, #tpu.memory_space<vmem>>, vector<8x256xbf16>
    %cst = arith.constant dense<0.000000e+00> : vector<128x256xf32>
    %8 = tpu.matmul %6, %7, %cst {dimension_numbers = #tpu.dot_dimension_numbers<[0], [0], [1], [1], [0, 1, 1, 1], [], []>} : vector<8x128xbf16>, vector<8x256xbf16>, vector<128x256xf32> -> vector<128x256xf32>
    %cst_3 = arith.constant dense<0xFF800000> : vector<128xf32>
    %9 = vector.multi_reduction <maximumf>, %8, %cst_3 [1] : vector<128x256xf32> to vector<128xf32>
    %10 = vector.shape_cast %9 : vector<128xf32> to vector<128x1xf32>
    %11 = vector.broadcast %10 : vector<128x1xf32> to vector<128x256xf32>
    %12 = arith.subf %8, %11 : vector<128x256xf32>
    %13 = math.exp %12 : vector<128x256xf32>
    %cst_4 = arith.constant dense<0.000000e+00> : vector<128xf32>
    %14 = vector.multi_reduction <add>, %13, %cst_4 [1] : vector<128x256xf32> to vector<128xf32>
    %15 = vector.shape_cast %14 : vector<128xf32> to vector<128x1xf32>
    %16 = tpu.reciprocal %15 {approx = true} : vector<128x1xf32> -> vector<128x1xf32>
    %17 = vector.broadcast %16 : vector<128x1xf32> to vector<128x256xf32>
    %18 = arith.mulf %13, %17 : vector<128x256xf32>
    %19 = arith.truncf %18 : vector<128x256xf32> to vector<128x256xbf16>
    %c0_5 = arith.constant 0 : index
    %20 = arith.index_cast %4 : i32 to index
    %21 = vector.load %arg10[%c0_5, %20] : memref<33x256xf32, #tpu.memory_space<vmem>>, vector<33x128xf32>
    %22 = arith.truncf %21 : vector<33x128xf32> to vector<33x128xbf16>
    %c0_6 = arith.constant 0 : index
    %c0_7 = arith.constant 0 : index
    %23 = vector.load %arg11[%c0_6, %c0_7] : memref<33x256xf32, #tpu.memory_space<vmem>>, vector<33x256xf32>
    %cst_8 = arith.constant dense<0.000000e+00> : vector<33x256xf32>
    %24 = tpu.matmul %22, %19, %cst_8 {dimension_numbers = #tpu.dot_dimension_numbers<[1], [0], [0], [1], [0, 0, 1, 1], [], []>} : vector<33x128xbf16>, vector<128x256xbf16>, vector<33x256xf32> -> vector<33x256xf32>
    %25 = arith.addf %23, %24 : vector<33x256xf32>
    %c0_9 = arith.constant 0 : index
    %c0_10 = arith.constant 0 : index
    %26 = vector.load %arg11[%c0_9, %c0_10] : memref<33x256xf32, #tpu.memory_space<vmem>>, vector<33x256xf32>
    tpu.vector_store %arg11[%c0_9, %c0_10], %25 {strides = array<i32>} : memref<33x256xf32, #tpu.memory_space<vmem>>, vector<33x256xf32>,
    %c1_i32 = arith.constant 1 : i32
    %27 = arith.cmpi eq, %arg1, %c1_i32 : i32
    %28 = arith.extui %27 : i1 to i32
    %c0_i32_11 = arith.constant 0 : i32
    %29 = arith.cmpi ne, %28, %c0_i32_11 : i32
    scf.if %29 {
      %c0_12 = arith.constant 0 : index
      %c0_13 = arith.constant 0 : index
      %c0_14 = arith.constant 0 : index
      %30 = vector.load %arg2[%c0_12, %c0_13, %c0_14] : memref<1x32x256xf32, #tpu.memory_space<vmem>>, vector<1x32x256xf32>
      %31 = vector.shape_cast %30 : vector<1x32x256xf32> to vector<32x256xf32>
      %c32 = arith.constant 32 : index
      %c0_15 = arith.constant 0 : index
      %32 = vector.load %arg11[%c32, %c0_15] : memref<33x256xf32, #tpu.memory_space<vmem>>, vector<1x256xf32>
      %cst_16 = arith.constant 9.99999971E-10 : f32
      %33 = vector.broadcast %cst_16 : f32 to vector<1x256xf32>
      %34 = arith.addf %32, %33 : vector<1x256xf32>
      %35 = tpu.reciprocal %34 {approx = true} : vector<1x256xf32> -> vector<1x256xf32>
      %c0_17 = arith.constant 0 : index
      %c0_18 = arith.constant 0 : index
      %36 = vector.load %arg11[%c0_17, %c0_18] : memref<33x256xf32, #tpu.memory_space<vmem>>, vector<32x256xf32>
      %37 = vector.broadcast %35 : vector<1x256xf32> to vector<32x256xf32>
      %38 = arith.mulf %36, %37 : vector<32x256xf32>
      %39 = arith.subf %31, %38 : vector<32x256xf32>
      %40 = arith.truncf %39 : vector<32x256xf32> to vector<32x256xbf16>
      %c0_19 = arith.constant 0 : index
      %c0_20 = arith.constant 0 : index
      %41 = vector.load %arg6[%c0_19, %c0_20] : memref<32x32xbf16, #tpu.memory_space<vmem>>, vector<32x32xbf16>
      %cst_21 = arith.constant dense<0.000000e+00> : vector<32x256xf32>
      %42 = tpu.matmul %41, %40, %cst_21 {dimension_numbers = #tpu.dot_dimension_numbers<[1], [0], [0], [1], [0, 0, 1, 1], [], []>} : vector<32x32xbf16>, vector<32x256xbf16>, vector<32x256xf32> -> vector<32x256xf32>
      %c0_22 = arith.constant 0 : index
      %c0_23 = arith.constant 0 : index
      %43 = vector.load %arg7[%c0_22, %c0_23] : memref<32x1xf32, #tpu.memory_space<vmem>>, vector<32x1xf32>
      %44 = vector.broadcast %43 : vector<32x1xf32> to vector<32x256xf32>
      %45 = arith.addf %42, %44 : vector<32x256xf32>
      %cst_24 = arith.constant 0.000000e+00 : f32
      %46 = vector.broadcast %cst_24 : f32 to vector<32x256xf32>
      %47 = arith.maximumf %45, %46 : vector<32x256xf32>
      %48 = arith.addf %31, %47 : vector<32x256xf32>
      %c0_25 = arith.constant 0 : index
      %c0_26 = arith.constant 0 : index
      %c0_27 = arith.constant 0 : index
      %49 = vector.load %arg8[%c0_25, %c0_26, %c0_27] : memref<1x32x256xf32, #tpu.memory_space<vmem>>, vector<1x32x256xf32>
      %50 = vector.shape_cast %49 : vector<1x32x256xf32> to vector<32x256xf32>
      %51 = vector.shape_cast %48 : vector<32x256xf32> to vector<1x32x256xf32>
      tpu.vector_store %arg8[%c0_25, %c0_26, %c0_27], %51 {strides = array<i32>} : memref<1x32x256xf32, #tpu.memory_space<vmem>>, vector<1x32x256xf32>,
    } else {
    }
    return
  }
  func.func @transform_0(%arg0: i32, %arg1: i32) -> (i32, i32, i32) {
    %c0_i32 = arith.constant 0 : i32
    %c0_i32_0 = arith.constant 0 : i32
    %c0_i32_1 = arith.constant 0 : i32
    return %arg0, %c0_i32, %c0_i32_0 : i32, i32, i32
  }
  func.func @transform_1(%arg0: i32, %arg1: i32) -> (i32, i32) {
    %c0_i32 = arith.constant 0 : i32
    %c0_i32_0 = arith.constant 0 : i32
    %c0_i32_1 = arith.constant 0 : i32
    return %c0_i32, %c0_i32_0 : i32, i32
  }
  func.func @transform_2(%arg0: i32, %arg1: i32) -> (i32, i32) {
    %c0_i32 = arith.constant 0 : i32
    %c0_i32_0 = arith.constant 0 : i32
    %c0_i32_1 = arith.constant 0 : i32
    return %c0_i32, %c0_i32_0 : i32, i32
  }
  func.func @transform_3(%arg0: i32, %arg1: i32) -> (i32, i32) {
    %c0_i32 = arith.constant 0 : i32
    %c0_i32_0 = arith.constant 0 : i32
    %c0_i32_1 = arith.constant 0 : i32
    return %c0_i32, %c0_i32_0 : i32, i32
  }
  func.func @transform_4(%arg0: i32, %arg1: i32) -> (i32, i32) {
    %c0_i32 = arith.constant 0 : i32
    %c0_i32_0 = arith.constant 0 : i32
    %c0_i32_1 = arith.constant 0 : i32
    return %c0_i32, %c0_i32_0 : i32, i32
  }
  func.func @transform_5(%arg0: i32, %arg1: i32) -> (i32, i32) {
    %c0_i32 = arith.constant 0 : i32
    %c0_i32_0 = arith.constant 0 : i32
    %c0_i32_1 = arith.constant 0 : i32
    return %c0_i32, %c0_i32_0 : i32, i32
  }
  func.func @transform_6(%arg0: i32, %arg1: i32) -> (i32, i32, i32) {
    %c0_i32 = arith.constant 0 : i32
    %c0_i32_0 = arith.constant 0 : i32
    %c0_i32_1 = arith.constant 0 : i32
    return %arg0, %c0_i32, %c0_i32_0 : i32, i32, i32
  }
}

</mosaic_0001>

<llo_original>
// kernel: tpu_custom_call.1
$region0: #{tpu_custom_call.1}
  #allocation0 [shape = 'u32[]', space=smem, size = 0x4, offset = 0x4, fixed_abs, tag = 'smem constant byte address 0x4 - core index']
  #allocation1 [shape = 'u32[144,128]{1,0:T(1,128)}', space=vmem, size = 0x12000, scoped, tag = 'internal scratch']
  #allocation2 [shape = 'bf16[8,256]{1,0:T(8,128)(2,1)}', space=vmem, size = 0x1000, scoped, tag = 'scratch operand']
  #allocation3 [shape = 'f32[33,256]{1,0:T(8,128)}', space=vmem, size = 0xa000, scoped, tag = 'scratch operand']
  #allocation4 [shape = 'f32[33,256]{1,0:T(8,128)}', space=vmem, size = 0xa000, scoped, tag = 'scratch operand']
  %s0 = inlined_call_operand.hbm [shape: f32[2,32,256], index: 0, kind: input, shape index: {}]
  %s1 = inlined_call_operand.vmem [shape: bf16[8,32], index: 1, kind: input, shape index: {}]
  %s2 = inlined_call_operand.vmem [shape: bf16[32,32], index: 2, kind: input, shape index: {}]
  %s3 = inlined_call_operand.vmem [shape: f32[32,1], index: 3, kind: input, shape index: {}]
  %s4 = inlined_call_operand.vmem [shape: bf16[32,32], index: 4, kind: input, shape index: {}]
  %s5 = inlined_call_operand.vmem [shape: f32[32,1], index: 5, kind: input, shape index: {}]
  %s6 = inlined_call_operand.hbm [shape: f32[2,32,256], index: 6, kind: output, shape index: {}]
  %s7 = sld [smem:[#allocation0]]
  $region69: #{tpu_custom_call.1} parent=0
    _
  %s9 = ssub.s32 1, %s7
  %s10 = scalar_select 0, %s9, %s7
  $region1: #{tpu_custom_call.1} parent=0
    #allocation5 [shape = 'u8[65536]{0}', space=vmem, size = 0x10000, scoped, tag = 'input window, operand 0']
    #allocation6 [shape = 's32[2]{0}', space=sflag, size = 0x8, scoped, tag = 'scoped memory for tpu_custom_call.1']
    #allocation7 [shape = 's32[2]{0}', space=sflag, size = 0x8, scoped, tag = 'scoped memory for tpu_custom_call.1']
    #allocation8 [shape = 'u8[65536]{0}', space=vmem, size = 0x10000, scoped, tag = 'output window, operand 0']
    %11 = vsyncpa [#allocation6], 0
    %s12 = scalar_lea.sflag [#allocation6], 1
    %13 = vsyncpa %s12, 0
    %14 = vsyncpa [#allocation7], 0
    %s15 = scalar_lea.sflag [#allocation7], 1
    %16 = vsyncpa %s15, 0
    loop: start=0, step=1, limit=6
    $region2: #{tpu_custom_call.1} parent=1 // loop_pre_header
      _
    $region3: #{tpu_custom_call.1} parent=1 // loop_header
      %s18 = sphi 0, %s22
      %p19 = scmp.ge.s32.totalorder %s18, 6
      %s25 = sphi 0, %s37
      %s26 = sphi 0, %s33
      %s27 = sphi 0, %s25
      %s28 = sphi 0, %s26
      %s29 = sphi 0, %s27
      %s30 = sphi 0, %s28
      %s40 = sphi 0, %s42
      %s43 = sphi 0, %s40
      %s44 = sphi 0, %s43
      %s60 = sphi 0, %s44
      %s64 = sphi 0, %s64
      %s66 = sphi 0, %s64
      %s67 = sphi 0, %s66
      %s81 = sphi 0, %s67
      %s85 = sphi 0, %s85
      %s87 = sphi 0, %s85
      %s88 = sphi 0, %s87
      %s102 = sphi 0, %s88
      %s106 = sphi 0, %s106
      %s108 = sphi 0, %s106
      %s109 = sphi 0, %s108
      %s123 = sphi 0, %s109
      %s127 = sphi 0, %s127
      %s129 = sphi 0, %s127
      %s130 = sphi 0, %s129
      %s144 = sphi 0, %s130
      %s148 = sphi 0, %s148
      %s150 = sphi 0, %s148
      %s151 = sphi 0, %s150
      %s165 = sphi 0, %s151
      %s171 = sphi 0, %s173
      %s174 = sphi 0, %s171
      %s175 = sphi 0, %s174
      %s191 = sphi 0, %s175
    $region4: #{tpu_custom_call.1} parent=1 // loop_header_branch
      %21 = sbr.rel (%p19) target = $region8
    $region5: #{tpu_custom_call.1} parent=1 // loop_body
      %s23 = ssub.s32 %s18, 1
      %s24 = ssub.s32 %s18, 2
      %s31 = sadd.s32 1, %s26
      %p32 = scmp.ge.s32.totalorder %s31, 2
      %s33 = scalar_select %p32, 0, %s31
      %s34 = sadd.s32 1, %s25
      %s35 = scalar_select %p32, %s34, %s25
      %p36 = scmp.ge.s32.totalorder %s35, 2
      %s37 = scalar_select %p36, 0, %s35
      %s38 = ssub.s32 %s25, %s37
      %p39 = scmp.eq.s32.totalorder %s38, 0
      %s41 = sadd.s32 %s40, 1
      %s42 = scalar_select %p39, %s40, %s41
      %p45 = pneg %p39
      %p46 = scmp.eq.s32.totalorder %s18, 3
      %p47 = por %p45, %p46
      %p48 = scmp.ne.s32.totalorder %s40, %s43
      %p49 = scmp.eq.s32.totalorder %s18, 0
      %p50 = por %p48, %p49
      %p51 = scmp.ne.s32.totalorder %s40, %s43
      %p52 = scmp.eq.s32.totalorder %s23, 3
      %p53 = por %p51, %p52
      %p54 = scmp.ne.s32.totalorder %s43, %s44
      %p55 = scmp.eq.s32.totalorder %s23, 0
      %p56 = por %p54, %p55
      %p57 = scmp.ne.s32.totalorder %s43, %s44
      %p58 = scmp.eq.s32.totalorder %s24, 3
      %p59 = por %p57, %p58
      %p61 = scmp.ne.s32.totalorder %s44, %s60
      %p62 = scmp.eq.s32.totalorder %s24, 0
      %p63 = por %p61, %p62
      %s65 = sadd.s32 %s64, 1
      %p68 = scmp.eq.s32.totalorder %s18, 3
      %p69 = scmp.ne.s32.totalorder %s64, %s66
      %p70 = scmp.eq.s32.totalorder %s18, 0
      %p71 = por %p69, %p70
      %p72 = scmp.ne.s32.totalorder %s64, %s66
      %p73 = scmp.eq.s32.totalorder %s23, 3
      %p74 = por %p72, %p73
      %p75 = scmp.ne.s32.totalorder %s66, %s67
      %p76 = scmp.eq.s32.totalorder %s23, 0
      %p77 = por %p75, %p76
      %p78 = scmp.ne.s32.totalorder %s66, %s67
      %p79 = scmp.eq.s32.totalorder %s24, 3
      %p80 = por %p78, %p79
      %p82 = scmp.ne.s32.totalorder %s67, %s81
      %p83 = scmp.eq.s32.totalorder %s24, 0
      %p84 = por %p82, %p83
      %s86 = sadd.s32 %s85, 1
      %p89 = scmp.eq.s32.totalorder %s18, 3
      %p90 = scmp.ne.s32.totalorder %s85, %s87
      %p91 = scmp.eq.s32.totalorder %s18, 0
      %p92 = por %p90, %p91
      %p93 = scmp.ne.s32.totalorder %s85, %s87
      %p94 = scmp.eq.s32.totalorder %s23, 3
      %p95 = por %p93, %p94
      %p96 = scmp.ne.s32.totalorder %s87, %s88
      %p97 = scmp.eq.s32.totalorder %s23, 0
      %p98 = por %p96, %p97
      %p99 = scmp.ne.s32.totalorder %s87, %s88
      %p100 = scmp.eq.s32.totalorder %s24, 3
      %p101 = por %p99, %p100
      %p103 = scmp.ne.s32.totalorder %s88, %s102
      %p104 = scmp.eq.s32.totalorder %s24, 0
      %p105 = por %p103, %p104
      %s107 = sadd.s32 %s106, 1
      %p110 = scmp.eq.s32.totalorder %s18, 3
      %p111 = scmp.ne.s32.totalorder %s106, %s108
      %p112 = scmp.eq.s32.totalorder %s18, 0
      %p113 = por %p111, %p112
      %p114 = scmp.ne.s32.totalorder %s106, %s108
      %p115 = scmp.eq.s32.totalorder %s23, 3
      %p116 = por %p114, %p115
      %p117 = scmp.ne.s32.totalorder %s108, %s109
      %p118 = scmp.eq.s32.totalorder %s23, 0
      %p119 = por %p117, %p118
      %p120 = scmp.ne.s32.totalorder %s108, %s109
      %p121 = scmp.eq.s32.totalorder %s24, 3
      %p122 = por %p120, %p121
      %p124 = scmp.ne.s32.totalorder %s109, %s123
      %p125 = scmp.eq.s32.totalorder %s24, 0
      %p126 = por %p124, %p125
      %s128 = sadd.s32 %s127, 1
      %p131 = scmp.eq.s32.totalorder %s18, 3
      %p132 = scmp.ne.s32.totalorder %s127, %s129
      %p133 = scmp.eq.s32.totalorder %s18, 0
      %p134 = por %p132, %p133
      %p135 = scmp.ne.s32.totalorder %s127, %s129
      %p136 = scmp.eq.s32.totalorder %s23, 3
      %p137 = por %p135, %p136
      %p138 = scmp.ne.s32.totalorder %s129, %s130
      %p139 = scmp.eq.s32.totalorder %s23, 0
      %p140 = por %p138, %p139
      %p141 = scmp.ne.s32.totalorder %s129, %s130
      %p142 = scmp.eq.s32.totalorder %s24, 3
      %p143 = por %p141, %p142
      %p145 = scmp.ne.s32.totalorder %s130, %s144
      %p146 = scmp.eq.s32.totalorder %s24, 0
      %p147 = por %p145, %p146
      %s149 = sadd.s32 %s148, 1
      %p152 = scmp.eq.s32.totalorder %s18, 3
      %p153 = scmp.ne.s32.totalorder %s148, %s150
      %p154 = scmp.eq.s32.totalorder %s18, 0
      %p155 = por %p153, %p154
      %p156 = scmp.ne.s32.totalorder %s148, %s150
      %p157 = scmp.eq.s32.totalorder %s23, 3
      %p158 = por %p156, %p157
      %p159 = scmp.ne.s32.totalorder %s150, %s151
      %p160 = scmp.eq.s32.totalorder %s23, 0
      %p161 = por %p159, %p160
      %p162 = scmp.ne.s32.totalorder %s150, %s151
      %p163 = scmp.eq.s32.totalorder %s24, 3
      %p164 = por %p162, %p163
      %p166 = scmp.ne.s32.totalorder %s151, %s165
      %p167 = scmp.eq.s32.totalorder %s24, 0
      %p168 = por %p166, %p167
      %s169 = ssub.s32 %s25, %s37
      %p170 = scmp.eq.s32.totalorder %s169, 0
      %s172 = sadd.s32 %s171, 1
      %s173 = scalar_select %p170, %s171, %s172
      %p176 = pneg %p170
      %p177 = scmp.eq.s32.totalorder %s18, 3
      %p178 = por %p176, %p177
      %p179 = scmp.ne.s32.totalorder %s171, %s174
      %p180 = scmp.eq.s32.totalorder %s18, 0
      %p181 = por %p179, %p180
      %p182 = scmp.ne.s32.totalorder %s171, %s174
      %p183 = scmp.eq.s32.totalorder %s23, 3
      %p184 = por %p182, %p183
      %p185 = scmp.ne.s32.totalorder %s174, %s175
      %p186 = scmp.eq.s32.totalorder %s23, 0
      %p187 = por %p185, %p186
      %p188 = scmp.ne.s32.totalorder %s174, %s175
      %p189 = scmp.eq.s32.totalorder %s24, 3
      %p190 = por %p188, %p189
      %p192 = scmp.ne.s32.totalorder %s175, %s191
      %p193 = scmp.eq.s32.totalorder %s24, 0
      %p194 = por %p192, %p193
      %p195 = scmp.le.s32.totalorder 1, %s18
      %p196 = scmp.lt.s32.totalorder %s18, 5
      %p197 = pnand %p195, %p196
      %p198 = pneg %p197
      // Predicated region
      $region9: #{tpu_custom_call.1} parent=5 // pred_check
        _
      $region10: #{tpu_custom_call.1} parent=5 // pred_check_branch
        %200 = sbr.rel (%p197) target = $region12
      $region11: #{tpu_custom_call.1} parent=5 // pred_region
        %s201 = ssub.s32 %s18, 1
        // Predicated region
        $region13: #{tpu_custom_call.1} parent=11 // pred_check
          %p202 = pneg %p77
        $region14: #{tpu_custom_call.1} parent=11 // pred_check_branch
          %204 = sbr.rel (%p202) target = $region16
        $region15: #{tpu_custom_call.1} parent=11 // pred_region
          _
        $region16: #{tpu_custom_call.1} parent=11 // pred_fallthru
          _
        // Predicated region
        $region17: #{tpu_custom_call.1} parent=11 // pred_check
          %p205 = pneg %p98
        $region18: #{tpu_custom_call.1} parent=11 // pred_check_branch
          %207 = sbr.rel (%p205) target = $region20
        $region19: #{tpu_custom_call.1} parent=11 // pred_region
          _
        $region20: #{tpu_custom_call.1} parent=11 // pred_fallthru
          _
        // Predicated region
        $region21: #{tpu_custom_call.1} parent=11 // pred_check
          %p208 = pneg %p119
        $region22: #{tpu_custom_call.1} parent=11 // pred_check_branch
          %210 = sbr.rel (%p208) target = $region24
        $region23: #{tpu_custom_call.1} parent=11 // pred_region
          _
        $region24: #{tpu_custom_call.1} parent=11 // pred_fallthru
          _
        // Predicated region
        $region25: #{tpu_custom_call.1} parent=11 // pred_check
          %p211 = pneg %p140
        $region26: #{tpu_custom_call.1} parent=11 // pred_check_branch
          %213 = sbr.rel (%p211) target = $region28
        $region27: #{tpu_custom_call.1} parent=11 // pred_region
          _
        $region28: #{tpu_custom_call.1} parent=11 // pred_fallthru
          _
        // Predicated region
        $region29: #{tpu_custom_call.1} parent=11 // pred_check
          %p214 = pneg %p161
        $region30: #{tpu_custom_call.1} parent=11 // pred_check_branch
          %216 = sbr.rel (%p214) target = $region32
        $region31: #{tpu_custom_call.1} parent=11 // pred_region
          _
        $region32: #{tpu_custom_call.1} parent=11 // pred_fallthru
          _
      $region12: #{tpu_custom_call.1} parent=5 // pred_fallthru
        _
      %p217 = scmp.lt.s32.totalorder %s18, 4
      // Predicated region
      $region33: #{tpu_custom_call.1} parent=5 // pred_check
        %p218 = pneg %p217
      $region34: #{tpu_custom_call.1} parent=5 // pred_check_branch
        %220 = sbr.rel (%p218) target = $region36
      $region35: #{tpu_custom_call.1} parent=5 // pred_region
        // Predicated region
        $region37: #{tpu_custom_call.1} parent=35 // pred_check
          %p221 = pneg %p50
        $region38: #{tpu_custom_call.1} parent=35 // pred_check_branch
          %223 = sbr.rel (%p221) target = $region40
        $region39: #{tpu_custom_call.1} parent=35 // pred_region
          %s224 = sand.u32 %s40, 1
          %s225 = scalar_lea.sflag [#allocation6], %s224
          %s226 = sand.u32 %s40, 1
          %s227 = smul.addr %s226, 64
          %s228 = scalar_lea.vmem [#allocation5], %s227
          %s230 = ssub.s32 1024, 1024
          %231 = vsyncadd %s225, %s230
          %s232 = smul.addr %s25, 8
          %s233 = smul.addr %s232, 128
          %s234 = scalar_lea.hbm %s0, %s233
          %s235 = sshll.u32 %s228, 4
          %s236 = int_to_ptr.vmem [resolvable:$true] %s235
          %241 = dma.hbm_to_vmem [thread:$0]  %s234, 1024, %s236, %s225, 256, 256, 16
        $region40: #{tpu_custom_call.1} parent=35 // pred_fallthru
          _
      $region36: #{tpu_custom_call.1} parent=5 // pred_fallthru
        _
      %p242 = scmp.le.s32.totalorder 1, %s18
      %p243 = scmp.lt.s32.totalorder %s18, 5
      %p244 = pnand %p242, %p243
      %p245 = pneg %p244
      // Predicated region
      $region41: #{tpu_custom_call.1} parent=5 // pred_check
        _
      $region42: #{tpu_custom_call.1} parent=5 // pred_check_branch
        %247 = sbr.rel (%p244) target = $region44
      $region43: #{tpu_custom_call.1} parent=5 // pred_region
        %s248 = ssub.s32 %s18, 1
        %s249 = sand.u32 %s43, 1
        %s250 = scalar_lea.sflag [#allocation6], %s249
        %s251 = sand.u32 %s43, 1
        %s252 = smul.addr %s251, 64
        %s253 = scalar_lea.vmem [#allocation5], %s252
        // Predicated region
        $region45: #{tpu_custom_call.1} parent=43 // pred_check
          %p254 = pneg %p56
        $region46: #{tpu_custom_call.1} parent=43 // pred_check_branch
          %256 = sbr.rel (%p254) target = $region48
        $region47: #{tpu_custom_call.1} parent=43 // pred_region
          %257 = dma.done %s250, 1024
        $region48: #{tpu_custom_call.1} parent=43 // pred_fallthru
          _
        %s258 = sand.u32 %s43, 1
        %s259 = scalar_lea.sflag [#allocation6], %s258
        %s260 = sand.u32 %s43, 1
        %s261 = smul.addr %s260, 64
        %s262 = scalar_lea.vmem [#allocation5], %s261
        %p263 = pneg %p56
        %p264 = pneg %p53
        %p265 = pneg %p77
        %p266 = pneg %p74
        %p267 = pneg %p98
        %p268 = pneg %p95
        %p269 = pneg %p119
        %p270 = pneg %p116
        %p271 = pneg %p140
        %p272 = pneg %p137
        %p273 = pneg %p161
        %p274 = pneg %p158
        %p275 = pneg %p187
        %p276 = pneg %p184
        %s277 = sand.u32 %s174, 1
        %s278 = scalar_lea.sflag [#allocation7], %s277
        %s279 = sand.u32 %s174, 1
        %s280 = smul.addr %s279, 64
        %s281 = scalar_lea.vmem [#allocation8], %s280
        %p283 = scmp.eq.s32.totalorder %s28, 0
        // Predicated region
        $region49: #{tpu_custom_call.1} parent=43 // pred_check
          %p284 = pneg %p283
        $region50: #{tpu_custom_call.1} parent=43 // pred_check_branch
          %286 = sbr.rel (%p284) target = $region52
        $region51: #{tpu_custom_call.1} parent=43 // pred_region
          %v287 = vld [vmem:[%s253] sm:$0xff]
          %v288 = vld [vmem:[%s253 + $0x8] sm:$0xff]
          %v289 = vld [vmem:[%s253 + $0x10] sm:$0xff]
          %v290 = vld [vmem:[%s253 + $0x18] sm:$0xff]
          %v291 = vld [vmem:[%s253 + $0x20] sm:$0xff]
          %v292 = vld [vmem:[%s253 + $0x28] sm:$0xff]
          %v293 = vld [vmem:[%s253 + $0x30] sm:$0xff]
          %v294 = vld [vmem:[%s253 + $0x38] sm:$0xff]
          %v295 = vpack.c.bf16 %v289, %v287
          %v296 = vpack.c.bf16 %v290, %v288
          %v297 = vpack.c.bf16 %v293, %v291
          %v298 = vpack.c.bf16 %v294, %v292
          %v299 = vld [vmem:[%s1] sm:$0xf]
          %vm300 = vcmask 261120
          %v302 = vsel %vm300, %v299, 0
          %304 = vmatprep.subr.bf16.mxu0 %v296
          %305 = vmatpush1.bf16.msra.mxu0 %v295
          %306 = vmatprep.subr.bf16.mxu0 %v298
          %307 = vmatpush1.bf16.msra.mxu0 %v297
          %308 = vmatprep.subr.bf16.mxu0 0
          %309 = vmatpush1.bf16.msra.mxu0 0
          %310 = vmatprep.subr.bf16.mxu0 0
          %311 = vmatpush1.bf16.msra.mxu0 0
          %312 = vmatprep.subr.bf16.mxu0 0
          %313 = vmatpush1.bf16.msra.mxu0 0
          %314 = vmatprep.subr.bf16.mxu0 0
          %315 = vmatpush1.bf16.msra.mxu0 0
          %316 = vmatprep.subr.bf16.mxu0 0
          %317 = vmatpush1.bf16.msra.mxu0 0
          %318 = vmatprep.subr.bf16.mxu0 0
          %319 = vmatpush1.bf16.msra.mxu0 0
          %320 = vmatprep.subr.bf16.mxu0 0
          %321 = vmatpush1.bf16.msra.mxu0 0
          %322 = vmatprep.subr.bf16.mxu0 0
          %323 = vmatpush1.bf16.msra.mxu0 0
          %324 = vmatprep.subr.bf16.mxu0 0
          %325 = vmatpush1.bf16.msra.mxu0 0
          %326 = vmatprep.subr.bf16.mxu0 0
          %327 = vmatpush1.bf16.msra.mxu0 0
          %328 = vmatprep.subr.bf16.mxu0 0
          %329 = vmatpush1.bf16.msra.mxu0 0
          %330 = vmatprep.subr.bf16.mxu0 0
          %331 = vmatpush1.bf16.msra.mxu0 0
          %332 = vmatprep.subr.bf16.mxu0 0
          %333 = vmatpush1.bf16.msra.mxu0 0
          %334 = vmatprep.subr.bf16.mxu0 0
          %335 = vmatpush1.bf16.msra.mxu0 0
          %336 = vmatprep.mubr.bf16.mxu0 0
          %337 = vmatmul.mubr.bf16.gmra.mrb[0].mxu0 %v302
          %v338 = vpop.f32.mrb[0].mxu0
          %v339 = vadd.f32 0.0, %v338
          %v340 = vpop.f32.mrb[0].mxu0
          %v341 = vadd.f32 0.0, %v340
          %v342 = vpop.f32.mrb[0].mxu0
          %v343 = vpop.f32.mrb[0].mxu0
          %344 = vdwg.mxu0
          %v345 = vpack.c.bf16 %v339, %v339
          %v346 = vpack.c.bf16 %v341, %v341
          %v349 = vunpack.c.l.b16 %v345
          %v350 = vunpack.c.l.b16 %v346
          %v351 = vpack.c.b16 %v350, %v349
          %353 = vst [vmem:[#allocation2] sm:$0xff] %v351
          %v354 = vld [vmem:[%s2] sm:$0xf]
          %v355 = vld [vmem:[%s2 + $0x4] sm:$0xf]
          %v356 = vld [vmem:[%s2 + $0x8] sm:$0xf]
          %v357 = vld [vmem:[%s2 + $0xc] sm:$0xf]
          %v358 = vld [vmem:[%s3] sm:$0xff]
          %v359 = vld [vmem:[%s3 + $0x8] sm:$0xff]
          %v360 = vld [vmem:[%s3 + $0x10] sm:$0xff]
          %v361 = vld [vmem:[%s3 + $0x18] sm:$0xff]
          %363 = vset.pattern.permute.xlu0 0
          %364 = vperm.xlu0 %363, %v358
          %v365 = vpop.permute.xlu0 %364
          %368 = vset.pattern.permute.xlu0 0
          %369 = vperm.xlu0 %368, %v359
          %v370 = vpop.permute.xlu0 %369
          %373 = vset.pattern.permute.xlu0 0
          %374 = vperm.xlu0 %373, %v360
          %v375 = vpop.permute.xlu0 %374
          %378 = vset.pattern.permute.xlu0 0
          %379 = vperm.xlu0 %378, %v361
          %v380 = vpop.permute.xlu0 %379
          %v386 = vunpack.c.l.b16 %v354
          %v387 = vunpack.c.l.b16 %v355
          %v388 = vunpack.c.l.b16 %v356
          %v389 = vunpack.c.l.b16 %v357
          %v390 = vpack.c.b16 %v387, %v386
          %v391 = vpack.c.b16 %v389, %v388
          %v393 = vsel %vm300, %v390, 0
          %v396 = vsel %vm300, %v391, 0
          %398 = vmatprep.subr.bf16.mxu0 %v296
          %399 = vmatpush1.bf16.msra.mxu0 %v295
          %400 = vmatprep.subr.bf16.mxu0 %v298
          %401 = vmatpush1.bf16.msra.mxu0 %v297
          %402 = vmatprep.subr.bf16.mxu0 0
          %403 = vmatpush1.bf16.msra.mxu0 0
          %404 = vmatprep.subr.bf16.mxu0 0
          %405 = vmatpush1.bf16.msra.mxu0 0
          %406 = vmatprep.subr.bf16.mxu0 0
          %407 = vmatpush1.bf16.msra.mxu0 0
          %408 = vmatprep.subr.bf16.mxu0 0
          %409 = vmatpush1.bf16.msra.mxu0 0
          %410 = vmatprep.subr.bf16.mxu0 0
          %411 = vmatpush1.bf16.msra.mxu0 0
          %412 = vmatprep.subr.bf16.mxu0 0
          %413 = vmatpush1.bf16.msra.mxu0 0
          %414 = vmatprep.subr.bf16.mxu0 0
          %415 = vmatpush1.bf16.msra.mxu0 0
          %416 = vmatprep.subr.bf16.mxu0 0
          %417 = vmatpush1.bf16.msra.mxu0 0
          %418 = vmatprep.subr.bf16.mxu0 0
          %419 = vmatpush1.bf16.msra.mxu0 0
          %420 = vmatprep.subr.bf16.mxu0 0
          %421 = vmatpush1.bf16.msra.mxu0 0
          %422 = vmatprep.subr.bf16.mxu0 0
          %423 = vmatpush1.bf16.msra.mxu0 0
          %424 = vmatprep.subr.bf16.mxu0 0
          %425 = vmatpush1.bf16.msra.mxu0 0
          %426 = vmatprep.subr.bf16.mxu0 0
          %427 = vmatpush1.bf16.msra.mxu0 0
          %428 = vmatprep.subr.bf16.mxu0 0
          %429 = vmatpush1.bf16.msra.mxu0 0
          %430 = vmatprep.mubr.bf16.mxu0 0
          %431 = vmatmul.mubr.bf16.gmra.mrb[0].mxu0 %v393
          %v432 = vpop.f32.mrb[0].mxu0
          %v433 = vadd.f32 %v365, %v432
          %v434 = vpop.f32.mrb[0].mxu0
          %v435 = vadd.f32 %v365, %v434
          %v436 = vpop.f32.mrb[0].mxu0
          %v437 = vadd.f32 %v370, %v436
          %v438 = vpop.f32.mrb[0].mxu0
          %v439 = vadd.f32 %v370, %v438
          %440 = vmatprep.mubr.bf16.mxu0 0
          %441 = vmatmul.mubr.bf16.gmra.mrb[0].mxu0 %v396
          %v442 = vpop.f32.mrb[0].mxu0
          %v443 = vadd.f32 %v375, %v442
          %v444 = vpop.f32.mrb[0].mxu0
          %v445 = vadd.f32 %v375, %v444
          %v446 = vpop.f32.mrb[0].mxu0
          %v447 = vadd.f32 %v380, %v446
          %v448 = vpop.f32.mrb[0].mxu0
          %v449 = vadd.f32 %v380, %v448
          %450 = vdwg.mxu0
          %451 = vst [vmem:[#allocation3] sm:$0xff] %v433
          %452 = vst [vmem:[#allocation3 + $0x8] sm:$0xff] %v435
          %453 = vst [vmem:[#allocation3 + $0x10] sm:$0xff] %v437
          %454 = vst [vmem:[#allocation3 + $0x18] sm:$0xff] %v439
          %455 = vst [vmem:[#allocation3 + $0x20] sm:$0xff] %v443
          %456 = vst [vmem:[#allocation3 + $0x28] sm:$0xff] %v445
          %457 = vst [vmem:[#allocation3 + $0x30] sm:$0xff] %v447
          %458 = vst [vmem:[#allocation3 + $0x38] sm:$0xff] %v449
          %v459 = vlaneseq
          %vm460 = vcmp.ge.s32.totalorder %v459, 0
          %vm461 = vcmp.lt.s32.totalorder %v459, 256
          %vm462 = vmand %vm460, %vm461
          %s463 = scalar_lea.vmem [#allocation3], 64
          %464 = vst.msk [vmem:[%s463] ss:$8 sm:$0x3] %vm462, 1.0
          %465 = vst.msk [vmem:[%s463] ss:$8 sm:$0x0] %vm462, 1.0
          %466 = vst [vmem:[#allocation4] sm:$0xff] 0.0
          %467 = vst [vmem:[#allocation4 + $0x8] sm:$0xff] 0.0
          %468 = vst [vmem:[#allocation4 + $0x10] sm:$0xff] 0.0
          %469 = vst [vmem:[#allocation4 + $0x18] sm:$0xff] 0.0
          %470 = vst [vmem:[#allocation4 + $0x20] sm:$0xff] 0.0
          %471 = vst [vmem:[#allocation4 + $0x28] sm:$0xff] 0.0
          %472 = vst [vmem:[#allocation4 + $0x30] sm:$0xff] 0.0
          %473 = vst [vmem:[#allocation4 + $0x38] sm:$0xff] 0.0
          %474 = vst [vmem:[#allocation4 + $0x40] sm:$0x1] 0.0
          %475 = vst [vmem:[#allocation4 + $0x48] sm:$0x1] 0.0
        $region52: #{tpu_custom_call.1} parent=43 // pred_fallthru
          _
        %s476 = smul.u32 %s28, 128
        %s477 = sshra.s32 %s476, 7
        %s478 = sand.u32 %s476, 127
        %s479 = smul.addr %s477, 4
        %s480 = scalar_lea.vmem [#allocation2], %s479
        %v481 = vld [vmem:[%s480] sm:$0xf]
        %v482 = vld [vmem:[#allocation2] sm:$0xff]
        %483 = vxpose.xlu0.c.b16.start [1/8] %v481, 128
        %484 = vxpose.xlu0.c.b16.cont [2/8] 0, 128
        %485 = vxpose.xlu0.c.b16.cont [3/8] 0, 128
        %486 = vxpose.xlu0.c.b16.cont [4/8] 0, 128
        %487 = vxpose.xlu0.c.b16.cont [5/8] 0, 128
        %488 = vxpose.xlu0.c.b16.cont [6/8] 0, 128
        %489 = vxpose.xlu0.c.b16.cont [7/8] 0, 128
        %490 = vxpose.xlu0.c.b16.end [8/8] 0, 128
        %v491 = vpop.trf.xlu0
        %v492 = vpop.trf.xlu0
        %v493 = vpop.trf.xlu0
        %v494 = vpop.trf.xlu0
        %v495 = vpop.trf.xlu0
        %v496 = vpop.trf.xlu0
        %v497 = vpop.trf.xlu0
        %v498 = vpop.trf.xlu0
        %v500 = vunpack.c.l.b16 %v482
        %v501 = vunpack.c.h.b16 %v482
        %v502 = vpack.c.b16 %v500, %v500
        %v503 = vpack.c.b16 %v501, %v501
        %vm504 = vcmask 64512
        %v506 = vsel %vm504, %v491, 0
        %v509 = vsel %vm504, %v492, 0
        %v512 = vsel %vm504, %v493, 0
        %v515 = vsel %vm504, %v494, 0
        %v518 = vsel %vm504, %v495, 0
        %v521 = vsel %vm504, %v496, 0
        %v524 = vsel %vm504, %v497, 0
        %v527 = vsel %vm504, %v498, 0
        %vm529 = vcmask 1043456
        %v531 = vsel %vm529, %v502, 0
        %v534 = vsel %vm529, %v503, 0
        %536 = vmatprep.subr.bf16.mxu0 %v534
        %537 = vmatpush1.bf16.msra.mxu0 %v531
        %538 = vmatprep.subr.bf16.mxu0 0
        %539 = vmatpush1.bf16.msra.mxu0 0
        %540 = vmatprep.subr.bf16.mxu0 0
        %541 = vmatpush1.bf16.msra.mxu0 0
        %542 = vmatprep.subr.bf16.mxu0 0
        %543 = vmatpush1.bf16.msra.mxu0 0
        %544 = vmatprep.subr.bf16.mxu0 0
        %545 = vmatpush1.bf16.msra.mxu0 0
        %546 = vmatprep.subr.bf16.mxu0 0
        %547 = vmatpush1.bf16.msra.mxu0 0
        %548 = vmatprep.subr.bf16.mxu0 0
        %549 = vmatpush1.bf16.msra.mxu0 0
        %550 = vmatprep.subr.bf16.mxu0 0
        %551 = vmatpush1.bf16.msra.mxu0 0
        %552 = vmatprep.subr.bf16.mxu0 0
        %553 = vmatpush1.bf16.msra.mxu0 0
        %554 = vmatprep.subr.bf16.mxu0 0
        %555 = vmatpush1.bf16.msra.mxu0 0
        %556 = vmatprep.subr.bf16.mxu0 0
        %557 = vmatpush1.bf16.msra.mxu0 0
        %558 = vmatprep.subr.bf16.mxu0 0
        %559 = vmatpush1.bf16.msra.mxu0 0
        %560 = vmatprep.subr.bf16.mxu0 0
        %561 = vmatpush1.bf16.msra.mxu0 0
        %562 = vmatprep.subr.bf16.mxu0 0
        %563 = vmatpush1.bf16.msra.mxu0 0
        %564 = vmatprep.subr.bf16.mxu0 0
        %565 = vmatpush1.bf16.msra.mxu0 0
        %566 = vmatprep.subr.bf16.mxu0 0
        %567 = vmatpush1.bf16.msra.mxu0 0
        %568 = vmatprep.mubr.bf16.mxu0 0
        %569 = vmatmul.mubr.bf16.gmra.mrb[0].mxu0 %v506
        %v570 = vpop.f32.mrb[0].mxu0
        %v571 = vadd.f32 0.0, %v570
        %v572 = vpop.f32.mrb[0].mxu0
        %v573 = vadd.f32 0.0, %v572
        %v574 = vpop.f32.mrb[0].mxu0
        %v575 = vadd.f32 0.0, %v574
        %v576 = vpop.f32.mrb[0].mxu0
        %v577 = vadd.f32 0.0, %v576
        %578 = vmatprep.mubr.bf16.mxu0 0
        %579 = vmatmul.mubr.bf16.gmra.mrb[0].mxu0 %v509
        %v580 = vpop.f32.mrb[0].mxu0
        %v581 = vadd.f32 0.0, %v580
        %v582 = vpop.f32.mrb[0].mxu0
        %v583 = vadd.f32 0.0, %v582
        %v584 = vpop.f32.mrb[0].mxu0
        %v585 = vadd.f32 0.0, %v584
        %v586 = vpop.f32.mrb[0].mxu0
        %v587 = vadd.f32 0.0, %v586
        %588 = vmatprep.mubr.bf16.mxu0 0
        %589 = vmatmul.mubr.bf16.gmra.mrb[0].mxu0 %v512
        %v590 = vpop.f32.mrb[0].mxu0
        %v591 = vadd.f32 0.0, %v590
        %v592 = vpop.f32.mrb[0].mxu0
        %v593 = vadd.f32 0.0, %v592
        %v594 = vpop.f32.mrb[0].mxu0
        %v595 = vadd.f32 0.0, %v594
        %v596 = vpop.f32.mrb[0].mxu0
        %v597 = vadd.f32 0.0, %v596
        %598 = vmatprep.mubr.bf16.mxu0 0
        %599 = vmatmul.mubr.bf16.gmra.mrb[0].mxu0 %v515
        %v600 = vpop.f32.mrb[0].mxu0
        %v601 = vadd.f32 0.0, %v600
        %v602 = vpop.f32.mrb[0].mxu0
        %v603 = vadd.f32 0.0, %v602
        %v604 = vpop.f32.mrb[0].mxu0
        %v605 = vadd.f32 0.0, %v604
        %v606 = vpop.f32.mrb[0].mxu0
        %v607 = vadd.f32 0.0, %v606
        %608 = vmatprep.mubr.bf16.mxu0 0
        %609 = vmatmul.mubr.bf16.gmra.mrb[0].mxu0 %v518
        %v610 = vpop.f32.mrb[0].mxu0
        %v611 = vadd.f32 0.0, %v610
        %v612 = vpop.f32.mrb[0].mxu0
        %v613 = vadd.f32 0.0, %v612
        %v614 = vpop.f32.mrb[0].mxu0
        %v615 = vadd.f32 0.0, %v614
        %v616 = vpop.f32.mrb[0].mxu0
        %v617 = vadd.f32 0.0, %v616
        %618 = vmatprep.mubr.bf16.mxu0 0
        %619 = vmatmul.mubr.bf16.gmra.mrb[0].mxu0 %v521
        %v620 = vpop.f32.mrb[0].mxu0
        %v621 = vadd.f32 0.0, %v620
        %v622 = vpop.f32.mrb[0].mxu0
        %v623 = vadd.f32 0.0, %v622
        %v624 = vpop.f32.mrb[0].mxu0
        %v625 = vadd.f32 0.0, %v624
        %v626 = vpop.f32.mrb[0].mxu0
        %v627 = vadd.f32 0.0, %v626
        %628 = vmatprep.mubr.bf16.mxu0 0
        %629 = vmatmul.mubr.bf16.gmra.mrb[0].mxu0 %v524
        %v630 = vpop.f32.mrb[0].mxu0
        %v631 = vadd.f32 0.0, %v630
        %v632 = vpop.f32.mrb[0].mxu0
        %v633 = vadd.f32 0.0, %v632
        %v634 = vpop.f32.mrb[0].mxu0
        %v635 = vadd.f32 0.0, %v634
        %v636 = vpop.f32.mrb[0].mxu0
        %v637 = vadd.f32 0.0, %v636
        %638 = vmatprep.mubr.bf16.mxu0 0
        %639 = vmatmul.mubr.bf16.gmra.mrb[0].mxu0 %v527
        %v640 = vpop.f32.mrb[0].mxu0
        %v641 = vadd.f32 0.0, %v640
        %v642 = vpop.f32.mrb[0].mxu0
        %v643 = vadd.f32 0.0, %v642
        %v644 = vpop.f32.mrb[0].mxu0
        %v645 = vadd.f32 0.0, %v644
        %v646 = vpop.f32.mrb[0].mxu0
        %v647 = vadd.f32 0.0, %v646
        %648 = vdwg.mxu0
        %v649 = vmax.f32 %v571, %v573
        %650 = vmax.xlane.f32.xlu0 %v649
        %v651 = vpop.xlane.xlu0 %650
        %v652 = vmax.f32 %v575, %v577
        %653 = vmax.xlane.f32.xlu0 %v652
        %v654 = vpop.xlane.xlu0 %653
        %v655 = vmax.f32 %v581, %v583
        %656 = vmax.xlane.f32.xlu0 %v655
        %v657 = vpop.xlane.xlu0 %656
        %v658 = vmax.f32 %v585, %v587
        %659 = vmax.xlane.f32.xlu0 %v658
        %v660 = vpop.xlane.xlu0 %659
        %v661 = vmax.f32 %v591, %v593
        %662 = vmax.xlane.f32.xlu0 %v661
        %v663 = vpop.xlane.xlu0 %662
        %v664 = vmax.f32 %v595, %v597
        %665 = vmax.xlane.f32.xlu0 %v664
        %v666 = vpop.xlane.xlu0 %665
        %v667 = vmax.f32 %v601, %v603
        %668 = vmax.xlane.f32.xlu0 %v667
        %v669 = vpop.xlane.xlu0 %668
        %v670 = vmax.f32 %v605, %v607
        %671 = vmax.xlane.f32.xlu0 %v670
        %v672 = vpop.xlane.xlu0 %671
        %v673 = vmax.f32 %v611, %v613
        %674 = vmax.xlane.f32.xlu0 %v673
        %v675 = vpop.xlane.xlu0 %674
        %v676 = vmax.f32 %v615, %v617
        %677 = vmax.xlane.f32.xlu0 %v676
        %v678 = vpop.xlane.xlu0 %677
        %v679 = vmax.f32 %v621, %v623
        %680 = vmax.xlane.f32.xlu0 %v679
        %v681 = vpop.xlane.xlu0 %680
        %v682 = vmax.f32 %v625, %v627
        %683 = vmax.xlane.f32.xlu0 %v682
        %v684 = vpop.xlane.xlu0 %683
        %v685 = vmax.f32 %v631, %v633
        %686 = vmax.xlane.f32.xlu0 %v685
        %v687 = vpop.xlane.xlu0 %686
        %v688 = vmax.f32 %v635, %v637
        %689 = vmax.xlane.f32.xlu0 %v688
        %v690 = vpop.xlane.xlu0 %689
        %v691 = vmax.f32 %v641, %v643
        %692 = vmax.xlane.f32.xlu0 %v691
        %v693 = vpop.xlane.xlu0 %692
        %v694 = vmax.f32 %v645, %v647
        %695 = vmax.xlane.f32.xlu0 %v694
        %v696 = vpop.xlane.xlu0 %695
        %v697 = vsub.f32 %v571, %v651
        %v698 = vsub.f32 %v573, %v651
        %v699 = vsub.f32 %v575, %v654
        %v700 = vsub.f32 %v577, %v654
        %v701 = vsub.f32 %v581, %v657
        %v702 = vsub.f32 %v583, %v657
        %v703 = vsub.f32 %v585, %v660
        %v704 = vsub.f32 %v587, %v660
        %v705 = vsub.f32 %v591, %v663
        %v706 = vsub.f32 %v593, %v663
        %v707 = vsub.f32 %v595, %v666
        %v708 = vsub.f32 %v597, %v666
        %v709 = vsub.f32 %v601, %v669
        %v710 = vsub.f32 %v603, %v669
        %v711 = vsub.f32 %v605, %v672
        %v712 = vsub.f32 %v607, %v672
        %v713 = vsub.f32 %v611, %v675
        %v714 = vsub.f32 %v613, %v675
        %v715 = vsub.f32 %v615, %v678
        %v716 = vsub.f32 %v617, %v678
        %v717 = vsub.f32 %v621, %v681
        %v718 = vsub.f32 %v623, %v681
        %v719 = vsub.f32 %v625, %v684
        %v720 = vsub.f32 %v627, %v684
        %v721 = vsub.f32 %v631, %v687
        %v722 = vsub.f32 %v633, %v687
        %v723 = vsub.f32 %v635, %v690
        %v724 = vsub.f32 %v637, %v690
        %v725 = vsub.f32 %v641, %v693
        %v726 = vsub.f32 %v643, %v693
        %v727 = vsub.f32 %v645, %v696
        %v728 = vsub.f32 %v647, %v696
        %v729 = vmul.f32 %v697, 1.442695
        %v730 = vpow.pop %v729
        %v731 = vmul.f32 %v698, 1.442695
        %v732 = vpow.pop %v731
        %v733 = vmul.f32 %v699, 1.442695
        %v734 = vpow.pop %v733
        %v735 = vmul.f32 %v700, 1.442695
        %v736 = vpow.pop %v735
        %v737 = vmul.f32 %v701, 1.442695
        %v738 = vpow.pop %v737
        %v739 = vmul.f32 %v702, 1.442695
        %v740 = vpow.pop %v739
        %v741 = vmul.f32 %v703, 1.442695
        %v742 = vpow.pop %v741
        %v743 = vmul.f32 %v704, 1.442695
        %v744 = vpow.pop %v743
        %v745 = vmul.f32 %v705, 1.442695
        %v746 = vpow.pop %v745
        %v747 = vmul.f32 %v706, 1.442695
        %v748 = vpow.pop %v747
        %v749 = vmul.f32 %v707, 1.442695
        %v750 = vpow.pop %v749
        %v751 = vmul.f32 %v708, 1.442695
        %v752 = vpow.pop %v751
        %v753 = vmul.f32 %v709, 1.442695
        %v754 = vpow.pop %v753
        %v755 = vmul.f32 %v710, 1.442695
        %v756 = vpow.pop %v755
        %v757 = vmul.f32 %v711, 1.442695
        %v758 = vpow.pop %v757
        %v759 = vmul.f32 %v712, 1.442695
        %v760 = vpow.pop %v759
        %v761 = vmul.f32 %v713, 1.442695
        %v762 = vpow.pop %v761
        %v763 = vmul.f32 %v714, 1.442695
        %v764 = vpow.pop %v763
        %v765 = vmul.f32 %v715, 1.442695
        %v766 = vpow.pop %v765
        %v767 = vmul.f32 %v716, 1.442695
        %v768 = vpow.pop %v767
        %v769 = vmul.f32 %v717, 1.442695
        %v770 = vpow.pop %v769
        %v771 = vmul.f32 %v718, 1.442695
        %v772 = vpow.pop %v771
        %v773 = vmul.f32 %v719, 1.442695
        %v774 = vpow.pop %v773
        %v775 = vmul.f32 %v720, 1.442695
        %v776 = vpow.pop %v775
        %v777 = vmul.f32 %v721, 1.442695
        %v778 = vpow.pop %v777
        %v779 = vmul.f32 %v722, 1.442695
        %v780 = vpow.pop %v779
        %v781 = vmul.f32 %v723, 1.442695
        %v782 = vpow.pop %v781
        %v783 = vmul.f32 %v724, 1.442695
        %v784 = vpow.pop %v783
        %v785 = vmul.f32 %v725, 1.442695
        %v786 = vpow.pop %v785
        %v787 = vmul.f32 %v726, 1.442695
        %v788 = vpow.pop %v787
        %v789 = vmul.f32 %v727, 1.442695
        %v790 = vpow.pop %v789
        %v791 = vmul.f32 %v728, 1.442695
        %v792 = vpow.pop %v791
        %v793 = vadd.f32 %v730, %v732
        %794 = vadd.xlane.f32.xlu0 %v793
        %v795 = vpop.xlane.xlu0 %794
        %v796 = vadd.f32 %v734, %v736
        %797 = vadd.xlane.f32.xlu0 %v796
        %v798 = vpop.xlane.xlu0 %797
        %v799 = vadd.f32 %v738, %v740
        %800 = vadd.xlane.f32.xlu0 %v799
        %v801 = vpop.xlane.xlu0 %800
        %v802 = vadd.f32 %v742, %v744
        %803 = vadd.xlane.f32.xlu0 %v802
        %v804 = vpop.xlane.xlu0 %803
        %v805 = vadd.f32 %v746, %v748
        %806 = vadd.xlane.f32.xlu0 %v805
        %v807 = vpop.xlane.xlu0 %806
        %v808 = vadd.f32 %v750, %v752
        %809 = vadd.xlane.f32.xlu0 %v808
        %v810 = vpop.xlane.xlu0 %809
        %v811 = vadd.f32 %v754, %v756
        %812 = vadd.xlane.f32.xlu0 %v811
        %v813 = vpop.xlane.xlu0 %812
        %v814 = vadd.f32 %v758, %v760
        %815 = vadd.xlane.f32.xlu0 %v814
        %v816 = vpop.xlane.xlu0 %815
        %v817 = vadd.f32 %v762, %v764
        %818 = vadd.xlane.f32.xlu0 %v817
        %v819 = vpop.xlane.xlu0 %818
        %v820 = vadd.f32 %v766, %v768
        %821 = vadd.xlane.f32.xlu0 %v820
        %v822 = vpop.xlane.xlu0 %821
        %v823 = vadd.f32 %v770, %v772
        %824 = vadd.xlane.f32.xlu0 %v823
        %v825 = vpop.xlane.xlu0 %824
        %v826 = vadd.f32 %v774, %v776
        %827 = vadd.xlane.f32.xlu0 %v826
        %v828 = vpop.xlane.xlu0 %827
        %v829 = vadd.f32 %v778, %v780
        %830 = vadd.xlane.f32.xlu0 %v829
        %v831 = vpop.xlane.xlu0 %830
        %v832 = vadd.f32 %v782, %v784
        %833 = vadd.xlane.f32.xlu0 %v832
        %v834 = vpop.xlane.xlu0 %833
        %v835 = vadd.f32 %v786, %v788
        %836 = vadd.xlane.f32.xlu0 %v835
        %v837 = vpop.xlane.xlu0 %836
        %v838 = vadd.f32 %v790, %v792
        %839 = vadd.xlane.f32.xlu0 %v838
        %v840 = vpop.xlane.xlu0 %839
        %v841 = vrcp.pop %v795
        %v842 = vrcp.pop %v798
        %v843 = vrcp.pop %v801
        %v844 = vrcp.pop %v804
        %v845 = vrcp.pop %v807
        %v846 = vrcp.pop %v810
        %v847 = vrcp.pop %v813
        %v848 = vrcp.pop %v816
        %v849 = vrcp.pop %v819
        %v850 = vrcp.pop %v822
        %v851 = vrcp.pop %v825
        %v852 = vrcp.pop %v828
        %v853 = vrcp.pop %v831
        %v854 = vrcp.pop %v834
        %v855 = vrcp.pop %v837
        %v856 = vrcp.pop %v840
        %v857 = vmul.f32 %v730, %v841
        %v858 = vmul.f32 %v732, %v841
        %v859 = vmul.f32 %v734, %v842
        %v860 = vmul.f32 %v736, %v842
        %v861 = vmul.f32 %v738, %v843
        %v862 = vmul.f32 %v740, %v843
        %v863 = vmul.f32 %v742, %v844
        %v864 = vmul.f32 %v744, %v844
        %v865 = vmul.f32 %v746, %v845
        %v866 = vmul.f32 %v748, %v845
        %v867 = vmul.f32 %v750, %v846
        %v868 = vmul.f32 %v752, %v846
        %v869 = vmul.f32 %v754, %v847
        %v870 = vmul.f32 %v756, %v847
        %v871 = vmul.f32 %v758, %v848
        %v872 = vmul.f32 %v760, %v848
        %v873 = vmul.f32 %v762, %v849
        %v874 = vmul.f32 %v764, %v849
        %v875 = vmul.f32 %v766, %v850
        %v876 = vmul.f32 %v768, %v850
        %v877 = vmul.f32 %v770, %v851
        %v878 = vmul.f32 %v772, %v851
        %v879 = vmul.f32 %v774, %v852
        %v880 = vmul.f32 %v776, %v852
        %v881 = vmul.f32 %v778, %v853
        %v882 = vmul.f32 %v780, %v853
        %v883 = vmul.f32 %v782, %v854
        %v884 = vmul.f32 %v784, %v854
        %v885 = vmul.f32 %v786, %v855
        %v886 = vmul.f32 %v788, %v855
        %v887 = vmul.f32 %v790, %v856
        %v888 = vmul.f32 %v792, %v856
        %v889 = vpack.c.bf16 %v859, %v857
        %v890 = vpack.c.bf16 %v860, %v858
        %v891 = vpack.c.bf16 %v863, %v861
        %v892 = vpack.c.bf16 %v864, %v862
        %v893 = vpack.c.bf16 %v867, %v865
        %v894 = vpack.c.bf16 %v868, %v866
        %v895 = vpack.c.bf16 %v871, %v869
        %v896 = vpack.c.bf16 %v872, %v870
        %v897 = vpack.c.bf16 %v875, %v873
        %v898 = vpack.c.bf16 %v876, %v874
        %v899 = vpack.c.bf16 %v879, %v877
        %v900 = vpack.c.bf16 %v880, %v878
        %v901 = vpack.c.bf16 %v883, %v881
        %v902 = vpack.c.bf16 %v884, %v882
        %v903 = vpack.c.bf16 %v887, %v885
        %v904 = vpack.c.bf16 %v888, %v886
        %s905 = smul.addr %s477, 8
        %s906 = scalar_lea.vmem [#allocation3], %s905
        %v907 = vld [vmem:[%s906] sm:$0xff]
        %v908 = vld [vmem:[%s906 + $0x10] sm:$0xff]
        %v909 = vld [vmem:[%s906 + $0x20] sm:$0xff]
        %v910 = vld [vmem:[%s906 + $0x30] sm:$0xff]
        %v911 = vld [vmem:[%s906 + $0x40] sm:$0x1]
        %v912 = vpack.c.bf16 %v908, %v907
        %v913 = vpack.c.bf16 %v910, %v909
        %v914 = vpack.c.bf16 %v911, %v911
        %v915 = vld [vmem:[#allocation4] sm:$0xff]
        %v916 = vld [vmem:[#allocation4 + $0x8] sm:$0xff]
        %v917 = vld [vmem:[#allocation4 + $0x10] sm:$0xff]
        %v918 = vld [vmem:[#allocation4 + $0x18] sm:$0xff]
        %v919 = vld [vmem:[#allocation4 + $0x20] sm:$0xff]
        %v920 = vld [vmem:[#allocation4 + $0x28] sm:$0xff]
        %v921 = vld [vmem:[#allocation4 + $0x30] sm:$0xff]
        %v922 = vld [vmem:[#allocation4 + $0x38] sm:$0xff]
        %v923 = vld [vmem:[#allocation4 + $0x40] sm:$0x1]
        %v924 = vld [vmem:[#allocation4 + $0x48] sm:$0x1]
        %925 = vmatprep.subr.bf16.mxu0 %v890
        %926 = vmatpush1.bf16.msra.mxu0 %v889
        %927 = vmatprep.subr.bf16.mxu0 %v892
        %928 = vmatpush1.bf16.msra.mxu0 %v891
        %929 = vmatprep.subr.bf16.mxu0 %v894
        %930 = vmatpush1.bf16.msra.mxu0 %v893
        %931 = vmatprep.subr.bf16.mxu0 %v896
        %932 = vmatpush1.bf16.msra.mxu0 %v895
        %933 = vmatprep.subr.bf16.mxu0 %v898
        %934 = vmatpush1.bf16.msra.mxu0 %v897
        %935 = vmatprep.subr.bf16.mxu0 %v900
        %936 = vmatpush1.bf16.msra.mxu0 %v899
        %937 = vmatprep.subr.bf16.mxu0 %v902
        %938 = vmatpush1.bf16.msra.mxu0 %v901
        %939 = vmatprep.subr.bf16.mxu0 %v904
        %940 = vmatpush1.bf16.msra.mxu0 %v903
        %941 = vmatprep.subr.bf16.mxu0 0
        %942 = vmatpush1.bf16.msra.mxu0 0
        %943 = vmatprep.subr.bf16.mxu0 0
        %944 = vmatpush1.bf16.msra.mxu0 0
        %945 = vmatprep.subr.bf16.mxu0 0
        %946 = vmatpush1.bf16.msra.mxu0 0
        %947 = vmatprep.subr.bf16.mxu0 0
        %948 = vmatpush1.bf16.msra.mxu0 0
        %949 = vmatprep.subr.bf16.mxu0 0
        %950 = vmatpush1.bf16.msra.mxu0 0
        %951 = vmatprep.subr.bf16.mxu0 0
        %952 = vmatpush1.bf16.msra.mxu0 0
        %953 = vmatprep.subr.bf16.mxu0 0
        %954 = vmatpush1.bf16.msra.mxu0 0
        %955 = vmatprep.subr.bf16.mxu0 0
        %956 = vmatpush1.bf16.msra.mxu0 0
        %957 = vmatprep.mubr.bf16.mxu0 0
        %958 = vmatmul.mubr.bf16.gmra.mrb[0].mxu0 %v912
        %v959 = vpop.f32.mrb[0].mxu0
        %v960 = vadd.f32 0.0, %v959
        %v961 = vpop.f32.mrb[0].mxu0
        %v962 = vadd.f32 0.0, %v961
        %v963 = vpop.f32.mrb[0].mxu0
        %v964 = vadd.f32 0.0, %v963
        %v965 = vpop.f32.mrb[0].mxu0
        %v966 = vadd.f32 0.0, %v965
        %967 = vmatprep.mubr.bf16.mxu0 0
        %968 = vmatmul.mubr.bf16.gmra.mrb[0].mxu0 %v913
        %v969 = vpop.f32.mrb[0].mxu0
        %v970 = vadd.f32 0.0, %v969
        %v971 = vpop.f32.mrb[0].mxu0
        %v972 = vadd.f32 0.0, %v971
        %v973 = vpop.f32.mrb[0].mxu0
        %v974 = vadd.f32 0.0, %v973
        %v975 = vpop.f32.mrb[0].mxu0
        %v976 = vadd.f32 0.0, %v975
        %977 = vmatprep.mubr.bf16.mxu0 0
        %978 = vmatmul.mubr.bf16.gmra.mrb[0].mxu0 %v914
        %v979 = vpop.f32.mrb[0].mxu0
        %v980 = vadd.f32 0.0, %v979
        %v981 = vpop.f32.mrb[0].mxu0
        %v982 = vadd.f32 0.0, %v981
        %v983 = vpop.f32.mrb[0].mxu0
        %v984 = vpop.f32.mrb[0].mxu0
        %985 = vdwg.mxu0
        %v986 = vadd.f32 %v915, %v960
        %v987 = vadd.f32 %v916, %v962
        %v988 = vadd.f32 %v917, %v964
        %v989 = vadd.f32 %v918, %v966
        %v990 = vadd.f32 %v919, %v970
        %v991 = vadd.f32 %v920, %v972
        %v992 = vadd.f32 %v921, %v974
        %v993 = vadd.f32 %v922, %v976
        %v994 = vadd.f32 %v923, %v980
        %v995 = vadd.f32 %v924, %v982
        %996 = vst [vmem:[#allocation4] sm:$0xff] %v986
        %997 = vst [vmem:[#allocation4 + $0x8] sm:$0xff] %v987
        %998 = vst [vmem:[#allocation4 + $0x10] sm:$0xff] %v988
        %999 = vst [vmem:[#allocation4 + $0x18] sm:$0xff] %v989
        %1000 = vst [vmem:[#allocation4 + $0x20] sm:$0xff] %v990
        %1001 = vst [vmem:[#allocation4 + $0x28] sm:$0xff] %v991
        %1002 = vst [vmem:[#allocation4 + $0x30] sm:$0xff] %v992
        %1003 = vst [vmem:[#allocation4 + $0x38] sm:$0xff] %v993
        %1004 = vst [vmem:[#allocation4 + $0x40] sm:$0x1] %v994
        %1005 = vst [vmem:[#allocation4 + $0x48] sm:$0x1] %v995
        %p1006 = scmp.eq.s32.totalorder %s28, 1
        // Predicated region
        $region53: #{tpu_custom_call.1} parent=43 // pred_check
          %p1007 = pneg %p1006
        $region54: #{tpu_custom_call.1} parent=43 // pred_check_branch
          %1009 = sbr.rel (%p1007) target = $region56
        $region55: #{tpu_custom_call.1} parent=43 // pred_region
          %v1010 = vld [vmem:[%s253] sm:$0xff]
          %v1011 = vld [vmem:[%s253 + $0x8] sm:$0xff]
          %v1012 = vld [vmem:[%s253 + $0x10] sm:$0xff]
          %v1013 = vld [vmem:[%s253 + $0x18] sm:$0xff]
          %v1014 = vld [vmem:[%s253 + $0x20] sm:$0xff]
          %v1015 = vld [vmem:[%s253 + $0x28] sm:$0xff]
          %v1016 = vld [vmem:[%s253 + $0x30] sm:$0xff]
          %v1017 = vld [vmem:[%s253 + $0x38] sm:$0xff]
          %s1018 = scalar_lea.vmem [#allocation4], 64
          %v1019 = vld [vmem:[%s1018] ss:$8 sm:$0x3]
          %v1020 = vadd.f32 %v1019, 1e-09
          %v1021 = vrcp.pop %v1020
          %v1022 = vld [vmem:[#allocation4] sm:$0xff]
          %v1023 = vld [vmem:[#allocation4 + $0x8] sm:$0xff]
          %v1024 = vld [vmem:[#allocation4 + $0x10] sm:$0xff]
          %v1025 = vld [vmem:[#allocation4 + $0x18] sm:$0xff]
          %v1026 = vld [vmem:[#allocation4 + $0x20] sm:$0xff]
          %v1027 = vld [vmem:[#allocation4 + $0x28] sm:$0xff]
          %v1028 = vld [vmem:[#allocation4 + $0x30] sm:$0xff]
          %v1029 = vld [vmem:[#allocation4 + $0x38] sm:$0xff]
          %v1031 = vlaneseq
          %v1032 = vshrl.u32 %v1031, 7
          %v1033 = vsub.s32 0, %v1032
          %v1034 = vrot.slane %v1021, %v1033
          %v1035 = vlaneseq
          %v1036 = vshrl.u32 %v1035, 7
          %v1037 = vsub.s32 1, %v1036
          %v1038 = vrot.slane %v1021, %v1037
          %v1041 = vmul.f32 %v1022, %v1034
          %v1042 = vmul.f32 %v1023, %v1038
          %v1043 = vmul.f32 %v1024, %v1034
          %v1044 = vmul.f32 %v1025, %v1038
          %v1045 = vmul.f32 %v1026, %v1034
          %v1046 = vmul.f32 %v1027, %v1038
          %v1047 = vmul.f32 %v1028, %v1034
          %v1048 = vmul.f32 %v1029, %v1038
          %v1049 = vsub.f32 %v1010, %v1041
          %v1050 = vsub.f32 %v1011, %v1042
          %v1051 = vsub.f32 %v1012, %v1043
          %v1052 = vsub.f32 %v1013, %v1044
          %v1053 = vsub.f32 %v1014, %v1045
          %v1054 = vsub.f32 %v1015, %v1046
          %v1055 = vsub.f32 %v1016, %v1047
          %v1056 = vsub.f32 %v1017, %v1048
          %v1057 = vpack.c.bf16 %v1051, %v1049
          %v1058 = vpack.c.bf16 %v1052, %v1050
          %v1059 = vpack.c.bf16 %v1055, %v1053
          %v1060 = vpack.c.bf16 %v1056, %v1054
          %v1061 = vld [vmem:[%s4] sm:$0xf]
          %v1062 = vld [vmem:[%s4 + $0x4] sm:$0xf]
          %v1063 = vld [vmem:[%s4 + $0x8] sm:$0xf]
          %v1064 = vld [vmem:[%s4 + $0xc] sm:$0xf]
          %v1065 = vld [vmem:[%s5] sm:$0xff]
          %v1066 = vld [vmem:[%s5 + $0x8] sm:$0xff]
          %v1067 = vld [vmem:[%s5 + $0x10] sm:$0xff]
          %v1068 = vld [vmem:[%s5 + $0x18] sm:$0xff]
          %1070 = vset.pattern.permute.xlu0 0
          %1071 = vperm.xlu0 %1070, %v1065
          %v1072 = vpop.permute.xlu0 %1071
          %1075 = vset.pattern.permute.xlu0 0
          %1076 = vperm.xlu0 %1075, %v1066
          %v1077 = vpop.permute.xlu0 %1076
          %1080 = vset.pattern.permute.xlu0 0
          %1081 = vperm.xlu0 %1080, %v1067
          %v1082 = vpop.permute.xlu0 %1081
          %1085 = vset.pattern.permute.xlu0 0
          %1086 = vperm.xlu0 %1085, %v1068
          %v1087 = vpop.permute.xlu0 %1086
          %v1093 = vunpack.c.l.b16 %v1061
          %v1094 = vunpack.c.l.b16 %v1062
          %v1095 = vunpack.c.l.b16 %v1063
          %v1096 = vunpack.c.l.b16 %v1064
          %v1097 = vpack.c.b16 %v1094, %v1093
          %v1098 = vpack.c.b16 %v1096, %v1095
          %vm1099 = vcmask 261120
          %v1101 = vsel %vm1099, %v1097, 0
          %v1104 = vsel %vm1099, %v1098, 0
          %1106 = vmatprep.subr.bf16.mxu0 %v1058
          %1107 = vmatpush1.bf16.msra.mxu0 %v1057
          %1108 = vmatprep.subr.bf16.mxu0 %v1060
          %1109 = vmatpush1.bf16.msra.mxu0 %v1059
          %1110 = vmatprep.subr.bf16.mxu0 0
          %1111 = vmatpush1.bf16.msra.mxu0 0
          %1112 = vmatprep.subr.bf16.mxu0 0
          %1113 = vmatpush1.bf16.msra.mxu0 0
          %1114 = vmatprep.subr.bf16.mxu0 0
          %1115 = vmatpush1.bf16.msra.mxu0 0
          %1116 = vmatprep.subr.bf16.mxu0 0
          %1117 = vmatpush1.bf16.msra.mxu0 0
          %1118 = vmatprep.subr.bf16.mxu0 0
          %1119 = vmatpush1.bf16.msra.mxu0 0
          %1120 = vmatprep.subr.bf16.mxu0 0
          %1121 = vmatpush1.bf16.msra.mxu0 0
          %1122 = vmatprep.subr.bf16.mxu0 0
          %1123 = vmatpush1.bf16.msra.mxu0 0
          %1124 = vmatprep.subr.bf16.mxu0 0
          %1125 = vmatpush1.bf16.msra.mxu0 0
          %1126 = vmatprep.subr.bf16.mxu0 0
          %1127 = vmatpush1.bf16.msra.mxu0 0
          %1128 = vmatprep.subr.bf16.mxu0 0
          %1129 = vmatpush1.bf16.msra.mxu0 0
          %1130 = vmatprep.subr.bf16.mxu0 0
          %1131 = vmatpush1.bf16.msra.mxu0 0
          %1132 = vmatprep.subr.bf16.mxu0 0
          %1133 = vmatpush1.bf16.msra.mxu0 0
          %1134 = vmatprep.subr.bf16.mxu0 0
          %1135 = vmatpush1.bf16.msra.mxu0 0
          %1136 = vmatprep.subr.bf16.mxu0 0
          %1137 = vmatpush1.bf16.msra.mxu0 0
          %1138 = vmatprep.mubr.bf16.mxu0 0
          %1139 = vmatmul.mubr.bf16.gmra.mrb[0].mxu0 %v1101
          %v1140 = vpop.f32.mrb[0].mxu0
          %v1141 = vadd.f32 %v1072, %v1140
          %v1142 = vpop.f32.mrb[0].mxu0
          %v1143 = vadd.f32 %v1072, %v1142
          %v1144 = vpop.f32.mrb[0].mxu0
          %v1145 = vadd.f32 %v1077, %v1144
          %v1146 = vpop.f32.mrb[0].mxu0
          %v1147 = vadd.f32 %v1077, %v1146
          %1148 = vmatprep.mubr.bf16.mxu0 0
          %1149 = vmatmul.mubr.bf16.gmra.mrb[0].mxu0 %v1104
          %v1150 = vpop.f32.mrb[0].mxu0
          %v1151 = vadd.f32 %v1082, %v1150
          %v1152 = vpop.f32.mrb[0].mxu0
          %v1153 = vadd.f32 %v1082, %v1152
          %v1154 = vpop.f32.mrb[0].mxu0
          %v1155 = vadd.f32 %v1087, %v1154
          %v1156 = vpop.f32.mrb[0].mxu0
          %v1157 = vadd.f32 %v1087, %v1156
          %1158 = vdwg.mxu0
          %v1159 = vmax.f32 %v1141, 0.0
          %v1160 = vmax.f32 %v1143, 0.0
          %v1161 = vmax.f32 %v1145, 0.0
          %v1162 = vmax.f32 %v1147, 0.0
          %v1163 = vmax.f32 %v1151, 0.0
          %v1164 = vmax.f32 %v1153, 0.0
          %v1165 = vmax.f32 %v1155, 0.0
          %v1166 = vmax.f32 %v1157, 0.0
          %v1167 = vadd.f32 %v1010, %v1159
          %v1168 = vadd.f32 %v1011, %v1160
          %v1169 = vadd.f32 %v1012, %v1161
          %v1170 = vadd.f32 %v1013, %v1162
          %v1171 = vadd.f32 %v1014, %v1163
          %v1172 = vadd.f32 %v1015, %v1164
          %v1173 = vadd.f32 %v1016, %v1165
          %v1174 = vadd.f32 %v1017, %v1166
          %1175 = vst [vmem:[%s281] sm:$0xff] %v1167
          %1176 = vst [vmem:[%s281 + $0x8] sm:$0xff] %v1168
          %1177 = vst [vmem:[%s281 + $0x10] sm:$0xff] %v1169
          %1178 = vst [vmem:[%s281 + $0x18] sm:$0xff] %v1170
          %1179 = vst [vmem:[%s281 + $0x20] sm:$0xff] %v1171
          %1180 = vst [vmem:[%s281 + $0x28] sm:$0xff] %v1172
          %1181 = vst [vmem:[%s281 + $0x30] sm:$0xff] %v1173
          %1182 = vst [vmem:[%s281 + $0x38] sm:$0xff] %v1174
        $region56: #{tpu_custom_call.1} parent=43 // pred_fallthru
          _
        %s1183 = sand.u32 %s174, 1
        %s1184 = scalar_lea.sflag [#allocation7], %s1183
        %s1185 = sand.u32 %s174, 1
        %s1186 = smul.addr %s1185, 64
        %s1187 = scalar_lea.vmem [#allocation8], %s1186
        // Predicated region
        $region57: #{tpu_custom_call.1} parent=43 // pred_check
          %p1188 = pneg %p184
        $region58: #{tpu_custom_call.1} parent=43 // pred_check_branch
          %1190 = sbr.rel (%p1188) target = $region60
        $region59: #{tpu_custom_call.1} parent=43 // pred_region
          %s1192 = ssub.s32 1024, 1024
          %1193 = vsyncadd %s1184, %s1192
          %s1194 = smul.addr %s27, 8
          %s1195 = smul.addr %s1194, 128
          %s1196 = scalar_lea.hbm %s6, %s1195
          %s1197 = sshll.u32 %s1187, 4
          %s1198 = int_to_ptr.vmem [resolvable:$true] %s1197
          %1203 = dma.vmem_to_hbm [thread:$0]  %s1198, 1024, %s1196, %s1184, 256, 256, 16
        $region60: #{tpu_custom_call.1} parent=43 // pred_fallthru
          _
      $region44: #{tpu_custom_call.1} parent=5 // pred_fallthru
        _
      %p1204 = scmp.le.s32.totalorder 2, %s18
      // Predicated region
      $region61: #{tpu_custom_call.1} parent=5 // pred_check
        %p1205 = pneg %p1204
      $region62: #{tpu_custom_call.1} parent=5 // pred_check_branch
        %1207 = sbr.rel (%p1205) target = $region64
      $region63: #{tpu_custom_call.1} parent=5 // pred_region
        %s1208 = ssub.s32 %s18, 2
        // Predicated region
        $region65: #{tpu_custom_call.1} parent=63 // pred_check
          %p1209 = pneg %p190
        $region66: #{tpu_custom_call.1} parent=63 // pred_check_branch
          %1211 = sbr.rel (%p1209) target = $region68
        $region67: #{tpu_custom_call.1} parent=63 // pred_region
          %s1212 = sand.u32 %s175, 1
          %s1213 = scalar_lea.sflag [#allocation7], %s1212
          %s1214 = sand.u32 %s175, 1
          %s1215 = smul.addr %s1214, 64
          %s1216 = scalar_lea.vmem [#allocation8], %s1215
          %1217 = dma.done %s1213, 1024
        $region68: #{tpu_custom_call.1} parent=63 // pred_fallthru
          _
      $region64: #{tpu_custom_call.1} parent=5 // pred_fallthru
        _
    $region6: #{tpu_custom_call.1} parent=1 // loop_footer
      %s22 = sadd.s32 1, %s18
    $region7: #{tpu_custom_call.1} parent=1 // loop_footer_branch
      %17 = sbr.rel target = $region3
    $region8: #{tpu_custom_call.1} parent=1 // loop_exit
      _
    %1218 = vsyncpa [#allocation6], 1
    %s1219 = scalar_lea.sflag [#allocation6], 1
    %1220 = vsyncpa %s1219, 1
    %1221 = vsyncpa [#allocation7], 1
    %s1222 = scalar_lea.sflag [#allocation7], 1
    %1223 = vsyncpa %s1222, 1

</llo_original>
